<compile_context>
chip_gen: v7x
topology: tpu7x:2x2x1
jax: 0.10.0
libtpu: 0.0.40
codegen_flags: <defaults>
</compile_context>

<pallas_src>
import jax
import jax.numpy as jnp
from jax import lax
from jax.experimental import pallas as pl
from jax.experimental.pallas import tpu as pltpu

EPS = 1e-5


def _round_up(x, m):
    return ((x + m - 1) // m) * m


def _layernorm_f32(x_f32, gamma, beta):
    mean = jnp.mean(x_f32, axis=-1, keepdims=True)
    centered = x_f32 - mean
    var = jnp.mean(centered * centered, axis=-1, keepdims=True)
    return centered * lax.rsqrt(var + EPS) * gamma + beta


def _make_kernel(have_res, resident):
    """Builds the fused add + LayerNorm + Linear kernel."""

    def kernel(*refs):
        if have_res:
            h_ref, r_ref, gamma_ref, beta_ref, w_ref, b_ref = refs[:6]
            rest = refs[6:]
        else:
            h_ref, gamma_ref, beta_ref, w_ref, b_ref = refs[:5]
            r_ref = None
            rest = refs[5:]

        def add_norm(res_ref):
            res = h_ref[...].astype(jnp.float32)
            if have_res:
                res = res + r_ref[...].astype(jnp.float32)
            res_ref[...] = res                      # residual_in_fp32
            return _layernorm_f32(res, gamma_ref[...], beta_ref[...])

        def mix(normed, out_ref):
            # PyTorch Linear: y = x @ W.T + b, W stored as (D_out, D_in).
            y = lax.dot_general(
                normed, w_ref[...],
                dimension_numbers=(((1,), (1,)), ((), ())),
                preferred_element_type=jnp.float32)
            out_ref[...] = (y + b_ref[...]).astype(out_ref.dtype)

        if resident:
            out_ref, res_ref = rest
            mix(add_norm(res_ref).astype(w_ref.dtype), out_ref)
        else:
            out_ref, res_ref, normed_ref = rest

            @pl.when(pl.program_id(1) == 0)
            def _():
                normed_ref[...] = add_norm(res_ref).astype(normed_ref.dtype)

            mix(normed_ref[...], out_ref)

    return kernel


def block_forward(hidden_states, residual, gamma, beta, w, b,
                  *, row_tile=512, col_tile=512, force_tiled=False):
    """hidden_states / residual: [B, L, D]; gamma/beta: [D];
    w: [D_out, D] (PyTorch Linear weight, (out, in)); b: [D_out].
    Returns (mixer_out [B, L, D_out], residual [B, L, D] in fp32)."""
    B, L, D = hidden_states.shape
    D_out, D_in = w.shape
    assert D_in == D
    N = B * L

    h2 = hidden_states.reshape(N, D)
    have_res = residual is not None
    r2 = residual.reshape(N, D) if have_res else None

    gamma2 = gamma.reshape(1, D).astype(jnp.float32)
    beta2 = beta.reshape(1, D).astype(jnp.float32)
    b2 = b.reshape(1, D_out).astype(jnp.float32)
    w2 = jnp.asarray(w)            # (D_out, D); no transpose / pad pass over HBM

    in_bytes = hidden_states.dtype.itemsize
    w_bytes = w2.dtype.itemsize

    # Per-chip VMEM capacity minus headroom (v7x: 64 MiB/TC, v5e/v6e: 128 MiB).
    try:
        vmem_cap = int(pltpu.get_tpu_info().vmem_capacity_bytes)
    except Exception:
        vmem_cap = 64 * 2**20
    usable = max(32 * 2**20, vmem_cap - 12 * 2**20)

    # Sublane alignment for the row-tile dimension.
    ra = 8 if in_bytes >= 4 else (16 if in_bytes == 2 else 32)

    if N <= ra:
        rt = N                      # full-dim block (always legal)
        candidates = [N]
    else:
        rt = min(row_tile, max(ra, (N // ra) * ra))
        if N >= 2 * ra:
            # v7x megacore: ensure the parallel row axis has >= 2 tiles.
            rt = min(rt, _round_up((N + 1) // 2, ra))
        rt = max(ra, (rt // ra) * ra)
        candidates = []
        for c in sorted({rt, 512, 256, 128, 64, ra}, reverse=True):
            c = max(ra, (min(c, rt) // ra) * ra)
            if c not in candidates:
                candidates.append(c)

    small = 8 * 4 * (D + D_out)     # gamma/beta/bias + slack

    def resident_budget(rt_):
        buf = 2 * D_out * D * w_bytes            # resident weight (conservative 2x)
        buf += 2 * rt_ * D * in_bytes            # hidden tile (double buffered)
        if have_res:
            buf += 2 * rt_ * D * in_bytes        # residual-in tile
        buf += 2 * rt_ * D_out * in_bytes        # mixer output tile
        buf += 2 * rt_ * D * 4                   # fp32 residual output tile
        return buf + small

    def tiled_budget(rt_, tn_):
        buf = 2 * rt_ * D * in_bytes
        if have_res:
            buf += 2 * rt_ * D * in_bytes
        buf += 2 * tn_ * D * w_bytes             # weight column tile
        buf += 2 * rt_ * tn_ * in_bytes
        buf += 2 * rt_ * D * 4
        buf += rt_ * D * w_bytes                 # normed scratch
        return buf + small

    resident = False
    if not force_tiled:
        for cand in candidates:
            if resident_budget(cand) <= usable:
                rt = cand
                resident = True
                break

    if resident:
        grid = (pl.cdiv(N, rt),)
        in_specs = [pl.BlockSpec((rt, D), lambda i: (i, 0))]
        if have_res:
            in_specs.append(pl.BlockSpec((rt, D), lambda i: (i, 0)))
        in_specs += [
            pl.BlockSpec((1, D), lambda i: (0, 0)),         # gamma
            pl.BlockSpec((1, D), lambda i: (0, 0)),         # beta
            pl.BlockSpec((D_out, D), lambda i: (0, 0)),     # weight: DMA'd once, resident
            pl.BlockSpec((1, D_out), lambda i: (0, 0)),     # bias
        ]
        out_specs = [pl.BlockSpec((rt, D_out), lambda i: (i, 0)),
                     pl.BlockSpec((rt, D), lambda i: (i, 0))]
        scratch = []
        semantics = ("parallel",)
    else:
        # Fallback: weight too large for VMEM residency -> column tiles on the
        # inner "arbitrary" axis; LN computed once per row tile into scratch.
        if D_out <= 128:
            tn = D_out
        else:
            tn = max(128, min((col_tile // 128) * 128, _round_up(D_out, 128)))
        while tiled_budget(rt, tn) > usable:
            if rt > max(ra, 64):
                rt = max(ra, ((rt // 2) // ra) * ra)
            elif tn > 128:
                tn = max(128, ((tn // 2) // 128) * 128)
            else:
                break
        grid = (pl.cdiv(N, rt), pl.cdiv(D_out, tn))
        in_specs = [pl.BlockSpec((rt, D), lambda i, j: (i, 0))]
        if have_res:
            in_specs.append(pl.BlockSpec((rt, D), lambda i, j: (i, 0)))
        in_specs += [
            pl.BlockSpec((1, D), lambda i, j: (0, 0)),
            pl.BlockSpec((1, D), lambda i, j: (0, 0)),
            pl.BlockSpec((tn, D), lambda i, j: (j, 0)),     # weight column tile
            pl.BlockSpec((1, tn), lambda i, j: (0, j)),
        ]
        out_specs = [pl.BlockSpec((rt, tn), lambda i, j: (i, j)),
                     pl.BlockSpec((rt, D), lambda i, j: (i, 0))]
        scratch = [pltpu.VMEM((rt, D), w2.dtype)]
        semantics = ("parallel", "arbitrary")

    args = (h2, r2, gamma2, beta2, w2, b2) if have_res else (h2, gamma2, beta2, w2, b2)

    out, res = pl.pallas_call(
        _make_kernel(have_res, resident),
        out_shape=(
            jax.ShapeDtypeStruct((N, D_out), hidden_states.dtype),
            jax.ShapeDtypeStruct((N, D), jnp.float32),      # residual_in_fp32
        ),
        grid_spec=pltpu.PrefetchScalarGridSpec(
            num_scalar_prefetch=0,
            grid=grid,
            in_specs=in_specs,
            out_specs=out_specs,
            scratch_shapes=scratch,
        ),
        compiler_params=pltpu.CompilerParams(
            dimension_semantics=semantics,
            vmem_limit_bytes=int(usable),
        ),
    )(*args)

    return out.reshape(B, L, D_out), res.reshape(B, L, D)


def _reference(hidden_states, residual, gamma, beta, w, b):
    res = hidden_states.astype(jnp.float32)
    if residual is not None:
        res = res + residual.astype(jnp.float32)
    mean = jnp.mean(res, axis=-1, keepdims=True)
    var = jnp.mean((res - mean) ** 2, axis=-1, keepdims=True)
    normed = (res - mean) * lax.rsqrt(var + EPS) * gamma.astype(jnp.float32) \
        + beta.astype(jnp.float32)
    out = normed @ w.T.astype(jnp.float32) + b.astype(jnp.float32)
    return out, res


if __name__ == "__main__":
    # TODO(synk): drop_path (p=0.0) and inference_params are identity/no-ops;
    # mixer_cls is instantiated as Linear(dim, dim) for this kernel.
    key = jax.random.PRNGKey(0)
    k_h, k_r, k_w, k_b = jax.random.split(key, 4)

    # ---- Test 1: fp32, with residual (weight-resident 1-D grid path). ----
    B, L, D = 2, 8, 32
    hidden = jax.random.normal(k_h, (B, L, D), dtype=jnp.float32)
    residual = jax.random.normal(k_r, (B, L, D), dtype=jnp.float32)
    gamma = jnp.ones((D,), dtype=jnp.float32)
    beta = jnp.zeros((D,), dtype=jnp.float32)
    w = jax.random.normal(k_w, (D, D), dtype=jnp.float32) * 0.05
    b = jax.random.normal(k_b, (D,), dtype=jnp.float32) * 0.05

    out, res = block_forward(hidden, residual, gamma, beta, w, b)
    out = jax.block_until_ready(out)
    res = jax.block_until_ready(res)
    ref_out, ref_res = _reference(hidden, residual, gamma, beta, w, b)
    assert jnp.allclose(out, ref_out, atol=2e-3, rtol=2e-3), "mixer output mismatch"
    assert jnp.allclose(res, ref_res, atol=1e-5, rtol=1e-5), "residual mismatch"

    # ---- Test 2: residual=None (first block path). ----
    out0, res0 = block_forward(hidden, None, gamma, beta, w, b)
    jax.block_until_ready(out0)
    ref_out0, ref_res0 = _reference(hidden, None, gamma, beta, w, b)
    assert jnp.allclose(out0, ref_out0, atol=2e-3, rtol=2e-3)
    assert jnp.allclose(res0, ref_res0, atol=1e-5, rtol=1e-5)

    # ---- Test 3: force the 2-D tiled fallback (column tiles + LN scratch). --
    D2 = 256
    k2_h, k2_r, k2_w, k2_b = jax.random.split(jax.random.PRNGKey(1), 4)
    hidden2 = jax.random.normal(k2_h, (B, L, D2), dtype=jnp.float32)
    residual2 = jax.random.normal(k2_r, (B, L, D2), dtype=jnp.float32)
    gamma2 = jnp.ones((D2,), dtype=jnp.float32)
    beta2 = jnp.zeros((D2,), dtype=jnp.float32)
    w2 = jax.random.normal(k2_w, (D2, D2), dtype=jnp.float32) * 0.02
    b2 = jax.random.normal(k2_b, (D2,), dtype=jnp.float32) * 0.02

    out2, res2 = block_forward(hidden2, residual2, gamma2, beta2, w2, b2,
                               col_tile=128, force_tiled=True)
    jax.block_until_ready(out2)
    ref_out2, ref_res2 = _reference(hidden2, residual2, gamma2, beta2, w2, b2)
    assert jnp.allclose(out2, ref_out2, atol=2e-3, rtol=2e-3), "tiled output mismatch"
    assert jnp.allclose(res2, ref_res2, atol=1e-5, rtol=1e-5), "tiled residual mismatch"

    # ---- Test 4: bf16 activations + bf16 weights (native MXU rate path). ----
    hidden_bf = hidden2.astype(jnp.bfloat16)
    residual_bf = residual2.astype(jnp.bfloat16)
    w_bf = w2.astype(jnp.bfloat16)
    b_bf = b2.astype(jnp.bfloat16)
    out_bf, res_bf = block_forward(hidden_bf, residual_bf, gamma2, beta2,
                                   w_bf, b_bf)
    jax.block_until_ready(out_bf)
    ref_out_bf, ref_res_bf = _reference(hidden_bf, residual_bf, gamma2, beta2,
                                        w_bf, b_bf)
    assert jnp.allclose(out_bf.astype(jnp.float32), ref_out_bf,
                        atol=5e-2, rtol=5e-2), "bf16 output mismatch"
    assert jnp.allclose(res_bf, ref_res_bf, atol=1e-5, rtol=1e-5), "bf16 residual mismatch"

    # ---- Test 5: N not a multiple of the row tile (masked partial blocks,
    #      no wrapper-side padding). ----
    B3, L3 = 2, 5                      # N = 10
    k3_h, k3_r = jax.random.split(jax.random.PRNGKey(2), 2)
    hidden3 = jax.random.normal(k3_h, (B3, L3, D2), dtype=jnp.float32)
    residual3 = jax.random.normal(k3_r, (B3, L3, D2), dtype=jnp.float32)
    out3, res3 = block_forward(hidden3, residual3, gamma2, beta2, w2, b2)
    jax.block_until_ready(out3)
    ref_out3, ref_res3 = _reference(hidden3, residual3, gamma2, beta2, w2, b2)
    assert jnp.allclose(out3, ref_out3, atol=2e-3, rtol=2e-3), "partial-block output mismatch"
    assert jnp.allclose(res3, ref_res3, atol=1e-5, rtol=1e-5), "partial-block residual mismatch"

    print("KERNEL_OK")
</pallas_src>

<mosaic_0001>
module attributes {stable_mosaic.version = 11 : i64} {
  func.func @kernel(%arg0: i32, %arg1: memref<8x32xf32, #tpu.memory_space<vmem>>, %arg2: memref<8x32xf32, #tpu.memory_space<vmem>>, %arg3: memref<1x32xf32, #tpu.memory_space<vmem>>, %arg4: memref<1x32xf32, #tpu.memory_space<vmem>>, %arg5: memref<32x32xf32, #tpu.memory_space<vmem>>, %arg6: memref<1x32xf32, #tpu.memory_space<vmem>>, %arg7: memref<8x32xf32, #tpu.memory_space<vmem>>, %arg8: memref<8x32xf32, #tpu.memory_space<vmem>>) attributes {dimension_semantics = [#tpu.dimension_semantics<parallel>], iteration_bounds = array<i64: 2>, scalar_prefetch = 0 : i64, scratch_operands = 0 : i64, tpu.core_type = #tpu.core_type<tc>, window_params = [{transform_indices = @transform_0, window_bounds = array<i64: 8, 32>}, {transform_indices = @transform_1, window_bounds = array<i64: 8, 32>}, {pipeline_mode = #tpu.pipeline_mode<synchronous>, transform_indices = @transform_2, window_bounds = array<i64: 1, 32>}, {pipeline_mode = #tpu.pipeline_mode<synchronous>, transform_indices = @transform_3, window_bounds = array<i64: 1, 32>}, {pipeline_mode = #tpu.pipeline_mode<synchronous>, transform_indices = @transform_4, window_bounds = array<i64: 32, 32>}, {pipeline_mode = #tpu.pipeline_mode<synchronous>, transform_indices = @transform_5, window_bounds = array<i64: 1, 32>}, {transform_indices = @transform_6, window_bounds = array<i64: 8, 32>}, {transform_indices = @transform_7, window_bounds = array<i64: 8, 32>}]} {
    %c0 = arith.constant 0 : index
    %c0_0 = arith.constant 0 : index
    %0 = vector.load %arg1[%c0, %c0_0] : memref<8x32xf32, #tpu.memory_space<vmem>>, vector<8x32xf32>
    %c0_1 = arith.constant 0 : index
    %c0_2 = arith.constant 0 : index
    %1 = vector.load %arg2[%c0_1, %c0_2] : memref<8x32xf32, #tpu.memory_space<vmem>>, vector<8x32xf32>
    %2 = arith.addf %0, %1 : vector<8x32xf32>
    %c0_3 = arith.constant 0 : index
    %c0_4 = arith.constant 0 : index
    %3 = vector.load %arg8[%c0_3, %c0_4] : memref<8x32xf32, #tpu.memory_space<vmem>>, vector<8x32xf32>
    tpu.vector_store %arg8[%c0_3, %c0_4], %2 {strides = array<i32>} : memref<8x32xf32, #tpu.memory_space<vmem>>, vector<8x32xf32>,
    %c0_5 = arith.constant 0 : index
    %c0_6 = arith.constant 0 : index
    %4 = vector.load %arg3[%c0_5, %c0_6] : memref<1x32xf32, #tpu.memory_space<vmem>>, vector<1x32xf32>
    %c0_7 = arith.constant 0 : index
    %c0_8 = arith.constant 0 : index
    %5 = vector.load %arg4[%c0_7, %c0_8] : memref<1x32xf32, #tpu.memory_space<vmem>>, vector<1x32xf32>
    %cst = arith.constant dense<0.000000e+00> : vector<8xf32>
    %6 = vector.multi_reduction <add>, %2, %cst [1] : vector<8x32xf32> to vector<8xf32>
    %7 = vector.shape_cast %6 : vector<8xf32> to vector<8x1xf32>
    %cst_9 = arith.constant 3.200000e+01 : f32
    %8 = vector.broadcast %cst_9 : f32 to vector<8x1xf32>
    %9 = arith.divf %7, %8 : vector<8x1xf32>
    %10 = vector.broadcast %9 : vector<8x1xf32> to vector<8x32xf32>
    %11 = arith.subf %2, %10 : vector<8x32xf32>
    %12 = arith.mulf %11, %11 : vector<8x32xf32>
    %cst_10 = arith.constant dense<0.000000e+00> : vector<8xf32>
    %13 = vector.multi_reduction <add>, %12, %cst_10 [1] : vector<8x32xf32> to vector<8xf32>
    %14 = vector.shape_cast %13 : vector<8xf32> to vector<8x1xf32>
    %cst_11 = arith.constant 3.200000e+01 : f32
    %15 = vector.broadcast %cst_11 : f32 to vector<8x1xf32>
    %16 = arith.divf %14, %15 : vector<8x1xf32>
    %cst_12 = arith.constant 9.99999974E-6 : f32
    %17 = vector.broadcast %cst_12 : f32 to vector<8x1xf32>
    %18 = arith.addf %16, %17 : vector<8x1xf32>
    %19 = math.rsqrt %18 : vector<8x1xf32>
    %20 = vector.broadcast %19 : vector<8x1xf32> to vector<8x32xf32>
    %21 = arith.mulf %11, %20 : vector<8x32xf32>
    %22 = vector.broadcast %4 : vector<1x32xf32> to vector<8x32xf32>
    %23 = arith.mulf %21, %22 : vector<8x32xf32>
    %24 = vector.broadcast %5 : vector<1x32xf32> to vector<8x32xf32>
    %25 = arith.addf %23, %24 : vector<8x32xf32>
    %c0_13 = arith.constant 0 : index
    %c0_14 = arith.constant 0 : index
    %26 = vector.load %arg5[%c0_13, %c0_14] : memref<32x32xf32, #tpu.memory_space<vmem>>, vector<32x32xf32>
    %cst_15 = arith.constant dense<0.000000e+00> : vector<8x32xf32>
    %27 = tpu.matmul %25, %26, %cst_15 {dimension_numbers = #tpu.dot_dimension_numbers<[1], [1], [0], [0], [0, 0, 1, 0], [], []>} : vector<8x32xf32>, vector<32x32xf32>, vector<8x32xf32> -> vector<8x32xf32>
    %c0_16 = arith.constant 0 : index
    %c0_17 = arith.constant 0 : index
    %28 = vector.load %arg6[%c0_16, %c0_17] : memref<1x32xf32, #tpu.memory_space<vmem>>, vector<1x32xf32>
    %29 = vector.broadcast %28 : vector<1x32xf32> to vector<8x32xf32>
    %30 = arith.addf %27, %29 : vector<8x32xf32>
    %c0_18 = arith.constant 0 : index
    %c0_19 = arith.constant 0 : index
    %31 = vector.load %arg7[%c0_18, %c0_19] : memref<8x32xf32, #tpu.memory_space<vmem>>, vector<8x32xf32>
    tpu.vector_store %arg7[%c0_18, %c0_19], %30 {strides = array<i32>} : memref<8x32xf32, #tpu.memory_space<vmem>>, vector<8x32xf32>,
    return
  }
  func.func @transform_0(%arg0: i32) -> (i32, i32) {
    %c0_i32 = arith.constant 0 : i32
    %c0_i32_0 = arith.constant 0 : i32
    return %arg0, %c0_i32 : i32, i32
  }
  func.func @transform_1(%arg0: i32) -> (i32, i32) {
    %c0_i32 = arith.constant 0 : i32
    %c0_i32_0 = arith.constant 0 : i32
    return %arg0, %c0_i32 : i32, i32
  }
  func.func @transform_2(%arg0: i32) -> (i32, i32) {
    %c0_i32 = arith.constant 0 : i32
    %c0_i32_0 = arith.constant 0 : i32
    %c0_i32_1 = arith.constant 0 : i32
    return %c0_i32, %c0_i32_0 : i32, i32
  }
  func.func @transform_3(%arg0: i32) -> (i32, i32) {
    %c0_i32 = arith.constant 0 : i32
    %c0_i32_0 = arith.constant 0 : i32
    %c0_i32_1 = arith.constant 0 : i32
    return %c0_i32, %c0_i32_0 : i32, i32
  }
  func.func @transform_4(%arg0: i32) -> (i32, i32) {
    %c0_i32 = arith.constant 0 : i32
    %c0_i32_0 = arith.constant 0 : i32
    %c0_i32_1 = arith.constant 0 : i32
    return %c0_i32, %c0_i32_0 : i32, i32
  }
  func.func @transform_5(%arg0: i32) -> (i32, i32) {
    %c0_i32 = arith.constant 0 : i32
    %c0_i32_0 = arith.constant 0 : i32
    %c0_i32_1 = arith.constant 0 : i32
    return %c0_i32, %c0_i32_0 : i32, i32
  }
  func.func @transform_6(%arg0: i32) -> (i32, i32) {
    %c0_i32 = arith.constant 0 : i32
    %c0_i32_0 = arith.constant 0 : i32
    return %arg0, %c0_i32 : i32, i32
  }
  func.func @transform_7(%arg0: i32) -> (i32, i32) {
    %c0_i32 = arith.constant 0 : i32
    %c0_i32_0 = arith.constant 0 : i32
    return %arg0, %c0_i32 : i32, i32
  }
}

</mosaic_0001>

<llo_original>
// kernel: tpu_custom_call.1
$region0: #{tpu_custom_call.1}
  #allocation0 [shape = 'u32[]', space=smem, size = 0x4, offset = 0x4, fixed_abs, tag = 'smem constant byte address 0x4 - core index']
  #allocation1 [shape = 'u32[144,128]{1,0:T(1,128)}', space=vmem, size = 0x12000, scoped, tag = 'internal scratch']
  %s0 = inlined_call_operand.hbm [shape: f32[16,32], index: 0, kind: input, shape index: {}]
  %s1 = inlined_call_operand.hbm [shape: f32[16,32], index: 1, kind: input, shape index: {}]
  %s2 = inlined_call_operand.vmem [shape: f32[1,32], index: 2, kind: input, shape index: {}]
  %s3 = inlined_call_operand.vmem [shape: f32[1,32], index: 3, kind: input, shape index: {}]
  %s4 = inlined_call_operand.hbm [shape: f32[32,32], index: 4, kind: input, shape index: {}]
  %s5 = inlined_call_operand.vmem [shape: f32[1,32], index: 5, kind: input, shape index: {}]
  %s6 = inlined_call_operand.hbm [shape: f32[16,32], index: 6, kind: output, shape index: {0}]
  %s7 = inlined_call_operand.hbm [shape: f32[16,32], index: 7, kind: output, shape index: {1}]
  %8 = xla_tuple %s6, %s7
  %s9 = sld [smem:[#allocation0]]
  $region77: #{tpu_custom_call.1} parent=0
    _
  %s11 = ssub.s32 1, %s9
  %s12 = scalar_select 0, %s11, %s9
  $region1: #{tpu_custom_call.1} parent=0
    #allocation2 [shape = 'u8[8192]{0}', space=vmem, size = 0x2000, scoped, tag = 'input window, operand 0']
    #allocation3 [shape = 's32[2]{0}', space=sflag, size = 0x8, scoped, tag = 'scoped memory for tpu_custom_call.1']
    #allocation4 [shape = 's32[2]{0}', space=sflag, size = 0x8, scoped, tag = 'scoped memory for tpu_custom_call.1']
    #allocation5 [shape = 'u8[8192]{0}', space=vmem, size = 0x2000, scoped, tag = 'input window, operand 1']
    #allocation6 [shape = 's32[2]{0}', space=sflag, size = 0x8, scoped, tag = 'scoped memory for tpu_custom_call.1']
    #allocation7 [shape = 'u8[16384]{0}', space=vmem, size = 0x4000, scoped, tag = 'input window, operand 4, single buffered']
    #allocation8 [shape = 'u8[8192]{0}', space=vmem, size = 0x2000, scoped, tag = 'output window, operand 0']
    #allocation9 [shape = 'u8[8192]{0}', space=vmem, size = 0x2000, scoped, tag = 'output window, operand 1']
    #allocation10 [shape = 's32[2]{0}', space=sflag, size = 0x8, scoped, tag = 'scoped memory for tpu_custom_call.1']
    %13 = vsyncpa [#allocation3], 0
    %s14 = scalar_lea.sflag [#allocation3], 1
    %15 = vsyncpa %s14, 0
    %16 = vsyncpa [#allocation6], 0
    %s17 = scalar_lea.sflag [#allocation6], 1
    %18 = vsyncpa %s17, 0
    %19 = vsyncpa [#allocation4], 0
    %s20 = scalar_lea.sflag [#allocation4], 1
    %21 = vsyncpa %s20, 0
    %22 = vsyncpa [#allocation10], 0
    %s23 = scalar_lea.sflag [#allocation10], 1
    %24 = vsyncpa %s23, 0
    loop: start=0, step=1, limit=4
    $region2: #{tpu_custom_call.1} parent=1 // loop_pre_header
      _
    $region3: #{tpu_custom_call.1} parent=1 // loop_header
      %s26 = sphi 0, %s30
      %p27 = scmp.ge.s32.totalorder %s26, 4
      %s36 = sphi 0, %s38
      %s39 = sphi 0, %s36
      %s40 = sphi 0, %s39
      %s56 = sphi 0, %s40
      %s62 = sphi 0, %s64
      %s65 = sphi 0, %s62
      %s66 = sphi 0, %s65
      %s82 = sphi 0, %s66
      %s86 = sphi 0, %s86
      %s88 = sphi 0, %s86
      %s89 = sphi 0, %s88
      %s103 = sphi 0, %s89
      %s107 = sphi 0, %s107
      %s109 = sphi 0, %s107
      %s110 = sphi 0, %s109
      %s124 = sphi 0, %s110
      %s128 = sphi 0, %s128
      %s130 = sphi 0, %s128
      %s131 = sphi 0, %s130
      %s145 = sphi 0, %s131
      %s149 = sphi 0, %s149
      %s151 = sphi 0, %s149
      %s152 = sphi 0, %s151
      %s166 = sphi 0, %s152
      %s172 = sphi 0, %s174
      %s175 = sphi 0, %s172
      %s176 = sphi 0, %s175
      %s192 = sphi 0, %s176
      %s198 = sphi 0, %s200
      %s201 = sphi 0, %s198
      %s202 = sphi 0, %s201
      %s218 = sphi 0, %s202
    $region4: #{tpu_custom_call.1} parent=1 // loop_header_branch
      %29 = sbr.rel (%p27) target = $region8
    $region5: #{tpu_custom_call.1} parent=1 // loop_body
      %s31 = ssub.s32 %s26, 1
      %s32 = ssub.s32 %s26, 2
      %s33 = sadd.s32 %s26, 1
      %s34 = ssub.s32 %s26, %s33
      %p35 = scmp.eq.s32.totalorder %s34, 0
      %s37 = sadd.s32 %s36, 1
      %s38 = scalar_select %p35, %s36, %s37
      %p41 = pneg %p35
      %p42 = scmp.eq.s32.totalorder %s26, 1
      %p43 = por %p41, %p42
      %p44 = scmp.ne.s32.totalorder %s36, %s39
      %p45 = scmp.eq.s32.totalorder %s26, 0
      %p46 = por %p44, %p45
      %p47 = scmp.ne.s32.totalorder %s36, %s39
      %p48 = scmp.eq.s32.totalorder %s31, 1
      %p49 = por %p47, %p48
      %p50 = scmp.ne.s32.totalorder %s39, %s40
      %p51 = scmp.eq.s32.totalorder %s31, 0
      %p52 = por %p50, %p51
      %p53 = scmp.ne.s32.totalorder %s39, %s40
      %p54 = scmp.eq.s32.totalorder %s32, 1
      %p55 = por %p53, %p54
      %p57 = scmp.ne.s32.totalorder %s40, %s56
      %p58 = scmp.eq.s32.totalorder %s32, 0
      %p59 = por %p57, %p58
      %s60 = ssub.s32 %s26, %s33
      %p61 = scmp.eq.s32.totalorder %s60, 0
      %s63 = sadd.s32 %s62, 1
      %s64 = scalar_select %p61, %s62, %s63
      %p67 = pneg %p61
      %p68 = scmp.eq.s32.totalorder %s26, 1
      %p69 = por %p67, %p68
      %p70 = scmp.ne.s32.totalorder %s62, %s65
      %p71 = scmp.eq.s32.totalorder %s26, 0
      %p72 = por %p70, %p71
      %p73 = scmp.ne.s32.totalorder %s62, %s65
      %p74 = scmp.eq.s32.totalorder %s31, 1
      %p75 = por %p73, %p74
      %p76 = scmp.ne.s32.totalorder %s65, %s66
      %p77 = scmp.eq.s32.totalorder %s31, 0
      %p78 = por %p76, %p77
      %p79 = scmp.ne.s32.totalorder %s65, %s66
      %p80 = scmp.eq.s32.totalorder %s32, 1
      %p81 = por %p79, %p80
      %p83 = scmp.ne.s32.totalorder %s66, %s82
      %p84 = scmp.eq.s32.totalorder %s32, 0
      %p85 = por %p83, %p84
      %s87 = sadd.s32 %s86, 1
      %p90 = scmp.eq.s32.totalorder %s26, 1
      %p91 = scmp.ne.s32.totalorder %s86, %s88
      %p92 = scmp.eq.s32.totalorder %s26, 0
      %p93 = por %p91, %p92
      %p94 = scmp.ne.s32.totalorder %s86, %s88
      %p95 = scmp.eq.s32.totalorder %s31, 1
      %p96 = por %p94, %p95
      %p97 = scmp.ne.s32.totalorder %s88, %s89
      %p98 = scmp.eq.s32.totalorder %s31, 0
      %p99 = por %p97, %p98
      %p100 = scmp.ne.s32.totalorder %s88, %s89
      %p101 = scmp.eq.s32.totalorder %s32, 1
      %p102 = por %p100, %p101
      %p104 = scmp.ne.s32.totalorder %s89, %s103
      %p105 = scmp.eq.s32.totalorder %s32, 0
      %p106 = por %p104, %p105
      %s108 = sadd.s32 %s107, 1
      %p111 = scmp.eq.s32.totalorder %s26, 1
      %p112 = scmp.ne.s32.totalorder %s107, %s109
      %p113 = scmp.eq.s32.totalorder %s26, 0
      %p114 = por %p112, %p113
      %p115 = scmp.ne.s32.totalorder %s107, %s109
      %p116 = scmp.eq.s32.totalorder %s31, 1
      %p117 = por %p115, %p116
      %p118 = scmp.ne.s32.totalorder %s109, %s110
      %p119 = scmp.eq.s32.totalorder %s31, 0
      %p120 = por %p118, %p119
      %p121 = scmp.ne.s32.totalorder %s109, %s110
      %p122 = scmp.eq.s32.totalorder %s32, 1
      %p123 = por %p121, %p122
      %p125 = scmp.ne.s32.totalorder %s110, %s124
      %p126 = scmp.eq.s32.totalorder %s32, 0
      %p127 = por %p125, %p126
      %s129 = sadd.s32 %s128, 1
      %p132 = scmp.eq.s32.totalorder %s26, 1
      %p133 = scmp.ne.s32.totalorder %s128, %s130
      %p134 = scmp.eq.s32.totalorder %s26, 0
      %p135 = por %p133, %p134
      %p136 = scmp.ne.s32.totalorder %s128, %s130
      %p137 = scmp.eq.s32.totalorder %s31, 1
      %p138 = por %p136, %p137
      %p139 = scmp.ne.s32.totalorder %s130, %s131
      %p140 = scmp.eq.s32.totalorder %s31, 0
      %p141 = por %p139, %p140
      %p142 = scmp.ne.s32.totalorder %s130, %s131
      %p143 = scmp.eq.s32.totalorder %s32, 1
      %p144 = por %p142, %p143
      %p146 = scmp.ne.s32.totalorder %s131, %s145
      %p147 = scmp.eq.s32.totalorder %s32, 0
      %p148 = por %p146, %p147
      %s150 = sadd.s32 %s149, 1
      %p153 = scmp.eq.s32.totalorder %s26, 1
      %p154 = scmp.ne.s32.totalorder %s149, %s151
      %p155 = scmp.eq.s32.totalorder %s26, 0
      %p156 = por %p154, %p155
      %p157 = scmp.ne.s32.totalorder %s149, %s151
      %p158 = scmp.eq.s32.totalorder %s31, 1
      %p159 = por %p157, %p158
      %p160 = scmp.ne.s32.totalorder %s151, %s152
      %p161 = scmp.eq.s32.totalorder %s31, 0
      %p162 = por %p160, %p161
      %p163 = scmp.ne.s32.totalorder %s151, %s152
      %p164 = scmp.eq.s32.totalorder %s32, 1
      %p165 = por %p163, %p164
      %p167 = scmp.ne.s32.totalorder %s152, %s166
      %p168 = scmp.eq.s32.totalorder %s32, 0
      %p169 = por %p167, %p168
      %s170 = ssub.s32 %s26, %s33
      %p171 = scmp.eq.s32.totalorder %s170, 0
      %s173 = sadd.s32 %s172, 1
      %s174 = scalar_select %p171, %s172, %s173
      %p177 = pneg %p171
      %p178 = scmp.eq.s32.totalorder %s26, 1
      %p179 = por %p177, %p178
      %p180 = scmp.ne.s32.totalorder %s172, %s175
      %p181 = scmp.eq.s32.totalorder %s26, 0
      %p182 = por %p180, %p181
      %p183 = scmp.ne.s32.totalorder %s172, %s175
      %p184 = scmp.eq.s32.totalorder %s31, 1
      %p185 = por %p183, %p184
      %p186 = scmp.ne.s32.totalorder %s175, %s176
      %p187 = scmp.eq.s32.totalorder %s31, 0
      %p188 = por %p186, %p187
      %p189 = scmp.ne.s32.totalorder %s175, %s176
      %p190 = scmp.eq.s32.totalorder %s32, 1
      %p191 = por %p189, %p190
      %p193 = scmp.ne.s32.totalorder %s176, %s192
      %p194 = scmp.eq.s32.totalorder %s32, 0
      %p195 = por %p193, %p194
      %s196 = ssub.s32 %s26, %s33
      %p197 = scmp.eq.s32.totalorder %s196, 0
      %s199 = sadd.s32 %s198, 1
      %s200 = scalar_select %p197, %s198, %s199
      %p203 = pneg %p197
      %p204 = scmp.eq.s32.totalorder %s26, 1
      %p205 = por %p203, %p204
      %p206 = scmp.ne.s32.totalorder %s198, %s201
      %p207 = scmp.eq.s32.totalorder %s26, 0
      %p208 = por %p206, %p207
      %p209 = scmp.ne.s32.totalorder %s198, %s201
      %p210 = scmp.eq.s32.totalorder %s31, 1
      %p211 = por %p209, %p210
      %p212 = scmp.ne.s32.totalorder %s201, %s202
      %p213 = scmp.eq.s32.totalorder %s31, 0
      %p214 = por %p212, %p213
      %p215 = scmp.ne.s32.totalorder %s201, %s202
      %p216 = scmp.eq.s32.totalorder %s32, 1
      %p217 = por %p215, %p216
      %p219 = scmp.ne.s32.totalorder %s202, %s218
      %p220 = scmp.eq.s32.totalorder %s32, 0
      %p221 = por %p219, %p220
      %p222 = scmp.le.s32.totalorder 1, %s26
      %p223 = scmp.lt.s32.totalorder %s26, 3
      %p224 = pnand %p222, %p223
      %p225 = pneg %p224
      // Predicated region
      $region9: #{tpu_custom_call.1} parent=5 // pred_check
        _
      $region10: #{tpu_custom_call.1} parent=5 // pred_check_branch
        %227 = sbr.rel (%p224) target = $region12
      $region11: #{tpu_custom_call.1} parent=5 // pred_region
        %s228 = ssub.s32 %s26, 1
        // Predicated region
        $region13: #{tpu_custom_call.1} parent=11 // pred_check
          %p229 = pneg %p99
        $region14: #{tpu_custom_call.1} parent=11 // pred_check_branch
          %231 = sbr.rel (%p229) target = $region16
        $region15: #{tpu_custom_call.1} parent=11 // pred_region
          _
        $region16: #{tpu_custom_call.1} parent=11 // pred_fallthru
          _
        // Predicated region
        $region17: #{tpu_custom_call.1} parent=11 // pred_check
          %p232 = pneg %p120
        $region18: #{tpu_custom_call.1} parent=11 // pred_check_branch
          %234 = sbr.rel (%p232) target = $region20
        $region19: #{tpu_custom_call.1} parent=11 // pred_region
          _
        $region20: #{tpu_custom_call.1} parent=11 // pred_fallthru
          _
        // Predicated region
        $region21: #{tpu_custom_call.1} parent=11 // pred_check
          %p235 = pneg %p141
        $region22: #{tpu_custom_call.1} parent=11 // pred_check_branch
          %237 = sbr.rel (%p235) target = $region24
        $region23: #{tpu_custom_call.1} parent=11 // pred_region
          %s239 = ssub.s32 512, 512
          %240 = vsyncadd [#allocation6], %s239
          %s241 = sshll.u32 [#allocation7], 4
          %s242 = int_to_ptr.vmem [resolvable:$true] %s241
          %247 = dma.hbm_to_vmem [thread:$0]  %s4, 512, %s242, [#allocation6], 128, 128, 8
        $region24: #{tpu_custom_call.1} parent=11 // pred_fallthru
          _
        // Predicated region
        $region25: #{tpu_custom_call.1} parent=11 // pred_check
          %p248 = pneg %p162
        $region26: #{tpu_custom_call.1} parent=11 // pred_check_branch
          %250 = sbr.rel (%p248) target = $region28
        $region27: #{tpu_custom_call.1} parent=11 // pred_region
          _
        $region28: #{tpu_custom_call.1} parent=11 // pred_fallthru
          _
      $region12: #{tpu_custom_call.1} parent=5 // pred_fallthru
        _
      %p251 = scmp.lt.s32.totalorder %s26, 2
      // Predicated region
      $region29: #{tpu_custom_call.1} parent=5 // pred_check
        %p252 = pneg %p251
      $region30: #{tpu_custom_call.1} parent=5 // pred_check_branch
        %254 = sbr.rel (%p252) target = $region32
      $region31: #{tpu_custom_call.1} parent=5 // pred_region
        // Predicated region
        $region33: #{tpu_custom_call.1} parent=31 // pred_check
          %p255 = pneg %p46
        $region34: #{tpu_custom_call.1} parent=31 // pred_check_branch
          %257 = sbr.rel (%p255) target = $region36
        $region35: #{tpu_custom_call.1} parent=31 // pred_region
          %s258 = sand.u32 %s36, 1
          %s259 = scalar_lea.sflag [#allocation3], %s258
          %s260 = sand.u32 %s36, 1
          %s261 = smul.addr %s260, 8
          %s262 = scalar_lea.vmem [#allocation2], %s261
          %s264 = ssub.s32 128, 128
          %265 = vsyncadd %s259, %s264
          %s266 = smul.addr %s26, 128
          %s267 = scalar_lea.hbm %s0, %s266
          %s269 = sshll.u32 %s262, 4
          %s270 = int_to_ptr.vmem [resolvable:$true] %s269
          %272 = dma.hbm_to_vmem [thread:$0]  %s267, 128, %s270, %s259
        $region36: #{tpu_custom_call.1} parent=31 // pred_fallthru
          _
        // Predicated region
        $region37: #{tpu_custom_call.1} parent=31 // pred_check
          %p273 = pneg %p72
        $region38: #{tpu_custom_call.1} parent=31 // pred_check_branch
          %275 = sbr.rel (%p273) target = $region40
        $region39: #{tpu_custom_call.1} parent=31 // pred_region
          %s276 = sand.u32 %s26, 1
          %s277 = scalar_lea.sflag [#allocation6], %s276
          %s278 = sand.u32 %s62, 1
          %s279 = smul.addr %s278, 8
          %s280 = scalar_lea.vmem [#allocation5], %s279
          %s282 = ssub.s32 128, 128
          %283 = vsyncadd %s277, %s282
          %s284 = smul.addr %s26, 128
          %s285 = scalar_lea.hbm %s1, %s284
          %s287 = sshll.u32 %s280, 4
          %s288 = int_to_ptr.vmem [resolvable:$true] %s287
          %290 = dma.hbm_to_vmem [thread:$0]  %s285, 128, %s288, %s277
        $region40: #{tpu_custom_call.1} parent=31 // pred_fallthru
          _
      $region32: #{tpu_custom_call.1} parent=5 // pred_fallthru
        _
      %p291 = scmp.le.s32.totalorder 1, %s26
      %p292 = scmp.lt.s32.totalorder %s26, 3
      %p293 = pnand %p291, %p292
      %p294 = pneg %p293
      // Predicated region
      $region41: #{tpu_custom_call.1} parent=5 // pred_check
        _
      $region42: #{tpu_custom_call.1} parent=5 // pred_check_branch
        %296 = sbr.rel (%p293) target = $region44
      $region43: #{tpu_custom_call.1} parent=5 // pred_region
        %s297 = ssub.s32 %s26, 1
        %s298 = sand.u32 %s39, 1
        %s299 = scalar_lea.sflag [#allocation3], %s298
        %s300 = sand.u32 %s39, 1
        %s301 = smul.addr %s300, 8
        %s302 = scalar_lea.vmem [#allocation2], %s301
        // Predicated region
        $region45: #{tpu_custom_call.1} parent=43 // pred_check
          %p303 = pneg %p52
        $region46: #{tpu_custom_call.1} parent=43 // pred_check_branch
          %305 = sbr.rel (%p303) target = $region48
        $region47: #{tpu_custom_call.1} parent=43 // pred_region
          %306 = dma.done %s299, 128
        $region48: #{tpu_custom_call.1} parent=43 // pred_fallthru
          _
        %s307 = sand.u32 %s31, 1
        %s308 = scalar_lea.sflag [#allocation6], %s307
        %s309 = sand.u32 %s65, 1
        %s310 = smul.addr %s309, 8
        %s311 = scalar_lea.vmem [#allocation5], %s310
        // Predicated region
        $region49: #{tpu_custom_call.1} parent=43 // pred_check
          %p312 = pneg %p78
        $region50: #{tpu_custom_call.1} parent=43 // pred_check_branch
          %314 = sbr.rel (%p312) target = $region52
        $region51: #{tpu_custom_call.1} parent=43 // pred_region
          %315 = dma.done %s308, 128
        $region52: #{tpu_custom_call.1} parent=43 // pred_fallthru
          _
        // Predicated region
        $region53: #{tpu_custom_call.1} parent=43 // pred_check
          %p316 = pneg %p141
        $region54: #{tpu_custom_call.1} parent=43 // pred_check_branch
          %318 = sbr.rel (%p316) target = $region56
        $region55: #{tpu_custom_call.1} parent=43 // pred_region
          %319 = dma.done [#allocation6], 512
        $region56: #{tpu_custom_call.1} parent=43 // pred_fallthru
          _
        %s320 = sand.u32 %s39, 1
        %s321 = scalar_lea.sflag [#allocation3], %s320
        %s322 = sand.u32 %s39, 1
        %s323 = smul.addr %s322, 8
        %s324 = scalar_lea.vmem [#allocation2], %s323
        %p325 = pneg %p52
        %p326 = pneg %p49
        %s327 = sand.u32 %s31, 1
        %s328 = scalar_lea.sflag [#allocation6], %s327
        %s329 = sand.u32 %s65, 1
        %s330 = smul.addr %s329, 8
        %s331 = scalar_lea.vmem [#allocation5], %s330
        %p332 = pneg %p78
        %p333 = pneg %p75
        %p334 = pneg %p99
        %p335 = pneg %p96
        %p336 = pneg %p120
        %p337 = pneg %p117
        %p338 = pneg %p141
        %p339 = pneg %p138
        %p340 = pneg %p162
        %p341 = pneg %p159
        %p342 = pneg %p188
        %p343 = pneg %p185
        %s344 = sand.u32 %s175, 1
        %s345 = scalar_lea.sflag [#allocation4], %s344
        %s346 = sand.u32 %s175, 1
        %s347 = smul.addr %s346, 8
        %s348 = scalar_lea.vmem [#allocation8], %s347
        %p349 = pneg %p214
        %p350 = pneg %p211
        %s351 = sand.u32 %s201, 1
        %s352 = scalar_lea.sflag [#allocation10], %s351
        %s353 = sand.u32 %s201, 1
        %s354 = smul.addr %s353, 8
        %s355 = scalar_lea.vmem [#allocation9], %s354
        %v356 = vld [vmem:[%s302] sm:$0xff]
        %v357 = vld [vmem:[%s311] sm:$0xff]
        %v358 = vadd.f32 %v356, %v357
        %vm359 = vcmask 261120
        %360 = vst.msk [vmem:[%s355] sm:$0xff] %vm359, %v358
        %v361 = vld [vmem:[%s2] sm:$0x1]
        %v362 = vld [vmem:[%s3] sm:$0x1]
        %v363 = vsel %vm359, %v358, 0.0
        %364 = vadd.xlane.f32.xlu0 %v363
        %v365 = vpop.xlane.xlu0 %364
        %v366 = vrcp.pop 32.0
        %v367 = vmul.f32 %v365, %v366
        %v368 = vsub.f32 %v358, %v367
        %v369 = vmul.f32 %v368, %v368
        %v370 = vsel %vm359, %v369, 0.0
        %371 = vadd.xlane.f32.xlu0 %v370
        %v372 = vpop.xlane.xlu0 %371
        %v373 = vmul.f32 %v372, %v366
        %v374 = vadd.f32 %v373, 1e-05
        %v375 = vrsqrt.pop %v374
        %v376 = vmul.f32 %v368, %v375
        %v378 = vlaneseq
        %v379 = vshrl.u32 %v378, 7
        %v380 = vsub.s32 0, %v379
        %v381 = vrot.slane %v361, %v380
        %v383 = vmul.f32 %v376, %v381
        %v385 = vlaneseq
        %v386 = vshrl.u32 %v385, 7
        %v387 = vsub.s32 0, %v386
        %v388 = vrot.slane %v362, %v387
        %v390 = vadd.f32 %v383, %v388
        %v391 = vld [vmem:[#allocation7] sm:$0xff]
        %v392 = vld [vmem:[#allocation7 + $0x8] sm:$0xff]
        %v393 = vld [vmem:[#allocation7 + $0x10] sm:$0xff]
        %v394 = vld [vmem:[#allocation7 + $0x18] sm:$0xff]
        %v395 = vld [vmem:[%s5] sm:$0x1]
        %v397 = vlaneseq
        %v398 = vshrl.u32 %v397, 7
        %v399 = vsub.s32 0, %v398
        %v400 = vrot.slane %v395, %v399
        %v403 = vsel %vm359, %v390, 0
        %v406 = vsel %vm359, %v391, 0
        %v409 = vsel %vm359, %v392, 0
        %v412 = vsel %vm359, %v393, 0
        %v415 = vsel %vm359, %v394, 0
        %417 = vmatprep.subr.mxu0 0.0
        %418 = vmatpush1.xpose.msra.mxu0 %v406
        %419 = vmatprep.subr.mxu0 0.0
        %420 = vmatpush1.xpose.msra.mxu0 %v409
        %421 = vmatprep.subr.mxu0 0.0
        %422 = vmatpush1.xpose.msra.mxu0 %v412
        %423 = vmatprep.subr.mxu0 0.0
        %424 = vmatpush1.xpose.msra.mxu0 %v415
        %425 = vmatprep.subr.mxu0 0.0
        %426 = vmatpush1.xpose.msra.mxu0 0.0
        %427 = vmatprep.subr.mxu0 0.0
        %428 = vmatpush1.xpose.msra.mxu0 0.0
        %429 = vmatprep.subr.mxu0 0.0
        %430 = vmatpush1.xpose.msra.mxu0 0.0
        %431 = vmatprep.subr.mxu0 0.0
        %432 = vmatpush1.xpose.msra.mxu0 0.0
        %433 = vmatprep.subr.mxu0 0.0
        %434 = vmatpush1.xpose.msra.mxu0 0.0
        %435 = vmatprep.subr.mxu0 0.0
        %436 = vmatpush1.xpose.msra.mxu0 0.0
        %437 = vmatprep.subr.mxu0 0.0
        %438 = vmatpush1.xpose.msra.mxu0 0.0
        %439 = vmatprep.subr.mxu0 0.0
        %440 = vmatpush1.xpose.msra.mxu0 0.0
        %441 = vmatprep.subr.mxu0 0.0
        %442 = vmatpush1.xpose.msra.mxu0 0.0
        %443 = vmatprep.subr.mxu0 0.0
        %444 = vmatpush1.xpose.msra.mxu0 0.0
        %445 = vmatprep.subr.mxu0 0.0
        %446 = vmatpush1.xpose.msra.mxu0 0.0
        %447 = vmatprep.subr.mxu0 0.0
        %448 = vmatpush1.xpose.msra.mxu0 0.0
        %449 = vmatprep.subr.mxu0 0.0
        %450 = vmatpush1.xpose.msra.mxu0 0.0
        %451 = vmatprep.subr.mxu0 0.0
        %452 = vmatpush1.xpose.msra.mxu0 0.0
        %453 = vmatprep.subr.mxu0 0.0
        %454 = vmatpush1.xpose.msra.mxu0 0.0
        %455 = vmatprep.subr.mxu0 0.0
        %456 = vmatpush1.xpose.msra.mxu0 0.0
        %457 = vmatprep.subr.mxu0 0.0
        %458 = vmatpush1.xpose.msra.mxu0 0.0
        %459 = vmatprep.subr.mxu0 0.0
        %460 = vmatpush1.xpose.msra.mxu0 0.0
        %461 = vmatprep.subr.mxu0 0.0
        %462 = vmatpush1.xpose.msra.mxu0 0.0
        %463 = vmatprep.subr.mxu0 0.0
        %464 = vmatpush1.xpose.msra.mxu0 0.0
        %465 = vmatprep.subr.mxu0 0.0
        %466 = vmatpush1.xpose.msra.mxu0 0.0
        %467 = vmatprep.subr.mxu0 0.0
        %468 = vmatpush1.xpose.msra.mxu0 0.0
        %469 = vmatprep.subr.mxu0 0.0
        %470 = vmatpush1.xpose.msra.mxu0 0.0
        %471 = vmatprep.subr.mxu0 0.0
        %472 = vmatpush1.xpose.msra.mxu0 0.0
        %473 = vmatprep.subr.mxu0 0.0
        %474 = vmatpush1.xpose.msra.mxu0 0.0
        %475 = vmatprep.subr.mxu0 0.0
        %476 = vmatpush1.xpose.msra.mxu0 0.0
        %477 = vmatprep.subr.mxu0 0.0
        %478 = vmatpush1.xpose.msra.mxu0 0.0
        %479 = vmatprep.subr.mxu0 0.0
        %480 = vmatpush1.xpose.msra.mxu0 0.0
        %481 = vmatprep.mubr.f32.mxu0 0.0
        %482 = vmatmul.mubr.f32.gmra.mrb[0].mxu0 %v403
        %v483 = vpop.f32.mrb[0].mxu0
        %v484 = vadd.f32 %v400, %v483
        %v485 = vpop.f32.mrb[0].mxu0
        %486 = vdwg.mxu0
        %487 = vst.msk [vmem:[%s348] sm:$0xff] %vm359, %v484
        %s488 = sand.u32 %s175, 1
        %s489 = scalar_lea.sflag [#allocation4], %s488
        %s490 = sand.u32 %s175, 1
        %s491 = smul.addr %s490, 8
        %s492 = scalar_lea.vmem [#allocation8], %s491
        %s493 = sand.u32 %s201, 1
        %s494 = scalar_lea.sflag [#allocation10], %s493
        %s495 = sand.u32 %s201, 1
        %s496 = smul.addr %s495, 8
        %s497 = scalar_lea.vmem [#allocation9], %s496
        // Predicated region
        $region57: #{tpu_custom_call.1} parent=43 // pred_check
          %p498 = pneg %p185
        $region58: #{tpu_custom_call.1} parent=43 // pred_check_branch
          %500 = sbr.rel (%p498) target = $region60
        $region59: #{tpu_custom_call.1} parent=43 // pred_region
          %s502 = ssub.s32 128, 128
          %503 = vsyncadd %s489, %s502
          %s504 = smul.addr %s31, 128
          %s505 = scalar_lea.hbm %s6, %s504
          %s507 = sshll.u32 %s492, 4
          %s508 = int_to_ptr.vmem [resolvable:$true] %s507
          %510 = dma.vmem_to_hbm [thread:$0]  %s508, 128, %s505, %s489
        $region60: #{tpu_custom_call.1} parent=43 // pred_fallthru
          _
        // Predicated region
        $region61: #{tpu_custom_call.1} parent=43 // pred_check
          %p511 = pneg %p211
        $region62: #{tpu_custom_call.1} parent=43 // pred_check_branch
          %513 = sbr.rel (%p511) target = $region64
        $region63: #{tpu_custom_call.1} parent=43 // pred_region
          %s515 = ssub.s32 128, 128
          %516 = vsyncadd %s494, %s515
          %s517 = smul.addr %s31, 128
          %s518 = scalar_lea.hbm %s7, %s517
          %s520 = sshll.u32 %s497, 4
          %s521 = int_to_ptr.vmem [resolvable:$true] %s520
          %523 = dma.vmem_to_hbm [thread:$0]  %s521, 128, %s518, %s494
        $region64: #{tpu_custom_call.1} parent=43 // pred_fallthru
          _
      $region44: #{tpu_custom_call.1} parent=5 // pred_fallthru
        _
      %p524 = scmp.le.s32.totalorder 2, %s26
      // Predicated region
      $region65: #{tpu_custom_call.1} parent=5 // pred_check
        %p525 = pneg %p524
      $region66: #{tpu_custom_call.1} parent=5 // pred_check_branch
        %527 = sbr.rel (%p525) target = $region68
      $region67: #{tpu_custom_call.1} parent=5 // pred_region
        %s528 = ssub.s32 %s26, 2
        // Predicated region
        $region69: #{tpu_custom_call.1} parent=67 // pred_check
          %p529 = pneg %p191
        $region70: #{tpu_custom_call.1} parent=67 // pred_check_branch
          %531 = sbr.rel (%p529) target = $region72
        $region71: #{tpu_custom_call.1} parent=67 // pred_region
          %s532 = sand.u32 %s176, 1
          %s533 = scalar_lea.sflag [#allocation4], %s532
          %s534 = sand.u32 %s176, 1
          %s535 = smul.addr %s534, 8
          %s536 = scalar_lea.vmem [#allocation8], %s535
          %537 = dma.done %s533, 128
        $region72: #{tpu_custom_call.1} parent=67 // pred_fallthru
          _
        // Predicated region
        $region73: #{tpu_custom_call.1} parent=67 // pred_check
          %p538 = pneg %p217
        $region74: #{tpu_custom_call.1} parent=67 // pred_check_branch
          %540 = sbr.rel (%p538) target = $region76
        $region75: #{tpu_custom_call.1} parent=67 // pred_region
          %s541 = sand.u32 %s202, 1
          %s542 = scalar_lea.sflag [#allocation10], %s541
          %s543 = sand.u32 %s202, 1
          %s544 = smul.addr %s543, 8
          %s545 = scalar_lea.vmem [#allocation9], %s544
          %546 = dma.done %s542, 128
        $region76: #{tpu_custom_call.1} parent=67 // pred_fallthru
          _
      $region68: #{tpu_custom_call.1} parent=5 // pred_fallthru
        _
    $region6: #{tpu_custom_call.1} parent=1 // loop_footer
      %s30 = sadd.s32 1, %s26
    $region7: #{tpu_custom_call.1} parent=1 // loop_footer_branch
      %25 = sbr.rel target = $region3
    $region8: #{tpu_custom_call.1} parent=1 // loop_exit
      _
    %547 = vsyncpa [#allocation3], 1
    %s548 = scalar_lea.sflag [#allocation3], 1
    %549 = vsyncpa %s548, 1
    %550 = vsyncpa [#allocation6], 1
    %s551 = scalar_lea.sflag [#allocation6], 1
    %552 = vsyncpa %s551, 1
    %553 = vsyncpa [#allocation4], 1
    %s554 = scalar_lea.sflag [#allocation4], 1
    %555 = vsyncpa %s554, 1
    %556 = vsyncpa [#allocation10], 1
    %s557 = scalar_lea.sflag [#allocation10], 1
    %558 = vsyncpa %s557, 1

</llo_original>
